<compile_context>
chip_gen: v7x
topology: tpu7x:2x2x1
jax: 0.10.0
libtpu: 0.0.40
codegen_flags: <defaults>
</compile_context>

<pallas_src>
import jax
import jax.numpy as jnp
from jax.experimental import pallas as pl
from jax.experimental.pallas import tpu as pltpu

_LANE = 128


def _round_up(x, m):
    return ((x + m - 1) // m) * m


def _decoder_kernel(z_ref, w_ref, b_ref, out_ref):
    # bf16 cast in-VMEM, MXU matmul with f32 accumulation, f32 log-softmax.
    z_bf16 = z_ref[...].astype(jnp.bfloat16)
    c = jnp.dot(z_bf16, w_ref[...],
                preferred_element_type=jnp.float32) + b_ref[...]   # (tile_n, O_pad)
    m = jnp.max(c, axis=1, keepdims=True)
    shifted = c - m
    lse = jnp.log(jnp.sum(jnp.exp(shifted), axis=1, keepdims=True))
    n_classes = out_ref.shape[1]            # real (unpadded) class count, static
    out_ref[...] = (shifted - lse)[:, :n_classes].astype(out_ref.dtype)


def prepare_graph_va_decoder_params(lin_weight, lin_bias):
    """One-time layout prep; hoist out of the per-call hot path for repeated
    inference.  Returns (W^T bf16 padded to a lane multiple, bias row with
    -1e30 on padded classes, real class count)."""
    O, H = lin_weight.shape
    O_pad = _round_up(max(O, _LANE), _LANE)
    w_p = jnp.zeros((H, O_pad), jnp.bfloat16).at[:, :O].set(
        lin_weight.T.astype(jnp.bfloat16))
    b_p = jnp.full((1, O_pad), -1e30, jnp.float32).at[0, :O].set(
        lin_bias.astype(jnp.float32))
    return w_p, b_p, O


def _choose_tile_n(N, H, out_cols, out_itemsize, tile_budget):
    tile_n = min(1024, _round_up(max(N, 1), 16))

    def _tile_bytes(t):
        # double-buffered f32 z tile + double-buffered output tile
        return 2 * t * H * 4 + 2 * t * out_cols * out_itemsize

    while tile_n > 16 and _tile_bytes(tile_n) > tile_budget:
        tile_n = _round_up(tile_n // 2, 16)
    return tile_n


def graph_va_decoder_node(z, adj, lin_weight=None, lin_bias=None, *,
                          dropout=0.0, training=False, rng_key=None,
                          prepared=None, out_dtype=jnp.float32):
    """Pallas implementation of GraphVADecoder_node.forward.

    z:          (N, H) node embeddings (float32)
    adj:        unused (interface parity with the PyTorch module)
    lin_weight: (O, H) nn.Linear weight (PyTorch layout); ignored if `prepared`
    lin_bias:   (O,)   nn.Linear bias;                    ignored if `prepared`
    prepared:   optional output of prepare_graph_va_decoder_params() to hoist
                the per-call weight/bias layout prep out of the hot path.
    """
    del adj  # not used by the PyTorch forward

    if training and dropout > 0.0:
        # TODO(synk): fuse the dropout mask into the kernel via the pltpu PRNG;
        # for now it is applied as one extra wrapper pass (training mode only).
        if rng_key is None:
            rng_key = jax.random.PRNGKey(0)
        keep = jax.random.bernoulli(rng_key, 1.0 - dropout, z.shape)
        z = jnp.where(keep, z / (1.0 - dropout), jnp.zeros((), z.dtype)).astype(z.dtype)

    if prepared is None:
        prepared = prepare_graph_va_decoder_params(lin_weight, lin_bias)
    w_p, b_p, O = prepared

    N, H = z.shape
    O_pad = w_p.shape[1]
    out_itemsize = jnp.dtype(out_dtype).itemsize

    # VMEM budget: generous on v5e/v6e (128 MiB), conservative on v7x (64 MiB).
    try:
        vmem_cap = int(pltpu.get_tpu_info().vmem_capacity_bytes)
    except Exception:
        vmem_cap = 64 * 1024 * 1024        # most conservative (v7x per-TC)
    vmem_limit = min(vmem_cap // 4 * 3, 96 * 1024 * 1024)

    # Constant (single-buffered) weight + bias residency; tile-independent.
    const_bytes = H * O_pad * 2 + O_pad * 4
    # TODO(synk): if the weight alone does not fit VMEM, tile the class axis
    # ("arbitrary" grid dim) with an online log-softmax instead of shrinking
    # the node tile; not needed for typical decoder class counts.
    tile_budget = max(vmem_limit - const_bytes - (4 << 20), 1 << 20)

    tile_n = _choose_tile_n(N, H, O, out_itemsize, tile_budget)
    grid_n = pl.cdiv(N, tile_n)
    if grid_n == 1 and N > 256:
        # Give both of v7x's TensorCores work (harmless on v5e/v6e).
        tile_n = _round_up(pl.cdiv(N, 2), 16)
        grid_n = pl.cdiv(N, tile_n)

    cost = pl.CostEstimate(
        flops=2 * N * H * O_pad,
        transcendentals=N * (O_pad + 1),                 # exp per logit + log per row
        bytes_accessed=N * H * 4 + H * O_pad * 2 + O_pad * 4 + N * O * out_itemsize,
    )

    return pl.pallas_call(
        _decoder_kernel,
        out_shape=jax.ShapeDtypeStruct((N, O), out_dtype),
        grid=(grid_n,),
        in_specs=[
            pl.BlockSpec((tile_n, H), lambda i: (i, 0)),          # z (pipelined, f32)
            pl.BlockSpec((H, O_pad), lambda i: (0, 0),
                         pipeline_mode=pl.Buffered(1)),           # weight (resident)
            pl.BlockSpec((1, O_pad), lambda i: (0, 0),
                         pipeline_mode=pl.Buffered(1)),           # bias   (resident)
        ],
        out_specs=pl.BlockSpec((tile_n, O), lambda i: (i, 0)),    # unpadded classes
        compiler_params=pltpu.CompilerParams(
            dimension_semantics=("parallel",),
            vmem_limit_bytes=vmem_limit,
        ),
        cost_estimate=cost,
    )(z, w_p, b_p)


# --------------------------------------------------------------------------- #
# References & self-test
# --------------------------------------------------------------------------- #
def _reference_f32(z, lin_weight, lin_bias):
    c = z @ lin_weight.T + lin_bias[None, :]
    return jax.nn.log_softmax(c, axis=1)


def _reference_bf16(z, lin_weight, lin_bias):
    c = jnp.dot(z.astype(jnp.bfloat16), lin_weight.T.astype(jnp.bfloat16),
                preferred_element_type=jnp.float32) + lin_bias[None, :].astype(jnp.float32)
    return jax.nn.log_softmax(c, axis=1)


if __name__ == "__main__":
    # Case 1: small shapes consistent with the module (N nodes, hidden_dim2, output_dim).
    N, hidden_dim2, output_dim = 8, 32, 16

    key = jax.random.PRNGKey(0)
    kz, kw, kb, ka = jax.random.split(key, 4)

    z = jax.random.normal(kz, (N, hidden_dim2), dtype=jnp.float32)
    adj = jax.random.normal(ka, (N, N), dtype=jnp.float32)   # unused in forward

    bound = 1.0 / jnp.sqrt(hidden_dim2)
    lin_weight = jax.random.uniform(
        kw, (output_dim, hidden_dim2), minval=-bound, maxval=bound, dtype=jnp.float32)
    lin_bias = jax.random.uniform(
        kb, (output_dim,), minval=-bound, maxval=bound, dtype=jnp.float32)

    # Hoist the weight/bias layout prep (would be cached across calls in real use).
    prepared = prepare_graph_va_decoder_params(lin_weight, lin_bias)

    out = graph_va_decoder_node(z, adj, lin_weight, lin_bias,
                                dropout=0.1, training=False, prepared=prepared)
    out = jax.block_until_ready(out)

    assert out.shape == (N, output_dim)
    assert bool(jnp.all(jnp.isfinite(out))), "non-finite log-probs"
    ref_bf16 = _reference_bf16(z, lin_weight, lin_bias)
    assert jnp.allclose(out, ref_bf16, atol=1e-4, rtol=1e-4), "mismatch vs bf16 reference"
    ref_f32 = _reference_f32(z, lin_weight, lin_bias)
    assert jnp.allclose(out, ref_f32, atol=5e-2, rtol=5e-2), "mismatch vs f32 reference"

    # Case 2: node count not a multiple of the tile and an odd class count
    # (exercises the boundary block and the narrow unpadded output store).
    N2, O2 = 200, 7
    z2 = jax.random.normal(jax.random.PRNGKey(1), (N2, hidden_dim2), dtype=jnp.float32)
    w2 = jax.random.uniform(jax.random.PRNGKey(2), (O2, hidden_dim2),
                            minval=-bound, maxval=bound, dtype=jnp.float32)
    b2 = jax.random.uniform(jax.random.PRNGKey(3), (O2,),
                            minval=-bound, maxval=bound, dtype=jnp.float32)
    out2 = jax.block_until_ready(graph_va_decoder_node(z2, None, w2, b2))
    assert out2.shape == (N2, O2)
    assert bool(jnp.all(jnp.isfinite(out2))), "non-finite log-probs (case 2)"
    assert jnp.allclose(out2, _reference_bf16(z2, w2, b2), atol=1e-4, rtol=1e-4), \
        "mismatch vs bf16 reference (case 2)"
    assert jnp.allclose(out2, _reference_f32(z2, w2, b2), atol=5e-2, rtol=5e-2), \
        "mismatch vs f32 reference (case 2)"

    print("KERNEL_OK")
</pallas_src>

<mosaic_0001>
module attributes {stable_mosaic.version = 11 : i64} {
  func.func @_decoder_kernel(%arg0: i32, %arg1: memref<16x32xf32, #tpu.memory_space<vmem>>, %arg2: memref<32x128xbf16, #tpu.memory_space<vmem>>, %arg3: memref<1x128xf32, #tpu.memory_space<vmem>>, %arg4: memref<16x16xf32, #tpu.memory_space<vmem>>) attributes {dimension_semantics = [#tpu.dimension_semantics<parallel>], iteration_bounds = array<i64: 1>, scalar_prefetch = 0 : i64, scratch_operands = 0 : i64, tpu.core_type = #tpu.core_type<tc>, window_params = [{transform_indices = @transform_0, window_bounds = array<i64: 16, 32>}, {pipeline_mode = #tpu.pipeline_mode<synchronous>, transform_indices = @transform_1, window_bounds = array<i64: 32, 128>}, {pipeline_mode = #tpu.pipeline_mode<synchronous>, transform_indices = @transform_2, window_bounds = array<i64: 1, 128>}, {transform_indices = @transform_3, window_bounds = array<i64: 16, 16>}]} {
    %c0 = arith.constant 0 : index
    %c0_0 = arith.constant 0 : index
    %0 = vector.load %arg1[%c0, %c0_0] : memref<16x32xf32, #tpu.memory_space<vmem>>, vector<16x32xf32>
    %1 = arith.truncf %0 : vector<16x32xf32> to vector<16x32xbf16>
    %c0_1 = arith.constant 0 : index
    %c0_2 = arith.constant 0 : index
    %2 = vector.load %arg2[%c0_1, %c0_2] : memref<32x128xbf16, #tpu.memory_space<vmem>>, vector<32x128xbf16>
    %cst = arith.constant dense<0.000000e+00> : vector<16x128xf32>
    %3 = tpu.matmul %1, %2, %cst {dimension_numbers = #tpu.dot_dimension_numbers<[1], [0], [0], [1], [0, 0, 1, 1], [], []>} : vector<16x32xbf16>, vector<32x128xbf16>, vector<16x128xf32> -> vector<16x128xf32>
    %c0_3 = arith.constant 0 : index
    %c0_4 = arith.constant 0 : index
    %4 = vector.load %arg3[%c0_3, %c0_4] : memref<1x128xf32, #tpu.memory_space<vmem>>, vector<1x128xf32>
    %5 = vector.broadcast %4 : vector<1x128xf32> to vector<16x128xf32>
    %6 = arith.addf %3, %5 : vector<16x128xf32>
    %cst_5 = arith.constant dense<0xFF800000> : vector<16xf32>
    %7 = vector.multi_reduction <maximumf>, %6, %cst_5 [1] : vector<16x128xf32> to vector<16xf32>
    %8 = vector.shape_cast %7 : vector<16xf32> to vector<16x1xf32>
    %9 = vector.broadcast %8 : vector<16x1xf32> to vector<16x128xf32>
    %10 = arith.subf %6, %9 : vector<16x128xf32>
    %11 = math.exp %10 : vector<16x128xf32>
    %cst_6 = arith.constant dense<0.000000e+00> : vector<16xf32>
    %12 = vector.multi_reduction <add>, %11, %cst_6 [1] : vector<16x128xf32> to vector<16xf32>
    %13 = vector.shape_cast %12 : vector<16xf32> to vector<16x1xf32>
    %14 = math.log %13 : vector<16x1xf32>
    %15 = vector.broadcast %14 : vector<16x1xf32> to vector<16x128xf32>
    %16 = arith.subf %10, %15 : vector<16x128xf32>
    %17 = vector.extract_strided_slice %16 {offsets = [0, 0], sizes = [16, 16], strides = [1, 1]} : vector<16x128xf32> to vector<16x16xf32>
    %c0_7 = arith.constant 0 : index
    %c0_8 = arith.constant 0 : index
    %18 = vector.load %arg4[%c0_7, %c0_8] : memref<16x16xf32, #tpu.memory_space<vmem>>, vector<16x16xf32>
    tpu.vector_store %arg4[%c0_7, %c0_8], %17 {strides = array<i32>} : memref<16x16xf32, #tpu.memory_space<vmem>>, vector<16x16xf32>,
    return
  }
  func.func @transform_0(%arg0: i32) -> (i32, i32) {
    %c0_i32 = arith.constant 0 : i32
    %c0_i32_0 = arith.constant 0 : i32
    return %arg0, %c0_i32 : i32, i32
  }
  func.func @transform_1(%arg0: i32) -> (i32, i32) {
    %c0_i32 = arith.constant 0 : i32
    %c0_i32_0 = arith.constant 0 : i32
    %c0_i32_1 = arith.constant 0 : i32
    return %c0_i32, %c0_i32_0 : i32, i32
  }
  func.func @transform_2(%arg0: i32) -> (i32, i32) {
    %c0_i32 = arith.constant 0 : i32
    %c0_i32_0 = arith.constant 0 : i32
    %c0_i32_1 = arith.constant 0 : i32
    return %c0_i32, %c0_i32_0 : i32, i32
  }
  func.func @transform_3(%arg0: i32) -> (i32, i32) {
    %c0_i32 = arith.constant 0 : i32
    %c0_i32_0 = arith.constant 0 : i32
    return %arg0, %c0_i32 : i32, i32
  }
}

</mosaic_0001>

<llo_original>
// kernel: tpu_custom_call.1
$region0: #{tpu_custom_call.1}
  #allocation0 [shape = 'u32[]', space=smem, size = 0x4, offset = 0x4, fixed_abs, tag = 'smem constant byte address 0x4 - core index']
  #allocation1 [shape = 'u32[144,128]{1,0:T(1,128)}', space=vmem, size = 0x12000, scoped, tag = 'internal scratch']
  %s0 = inlined_call_operand.hbm [shape: f32[8,32], index: 0, kind: input, shape index: {}]
  %s1 = inlined_call_operand.hbm [shape: bf16[32,128], index: 1, kind: input, shape index: {}]
  %s2 = inlined_call_operand.vmem [shape: f32[1,128], index: 2, kind: input, shape index: {}]
  %s3 = inlined_call_operand.hbm [shape: f32[8,16], index: 3, kind: output, shape index: {}]
  %s4 = sld [smem:[#allocation0]]
  $region30: #{tpu_custom_call.1} parent=0
    _
  %s6 = ssub.s32 1, %s4
  %s7 = scalar_select 0, %s6, %s4
  $region1: #{tpu_custom_call.1} parent=0
    #allocation2 [shape = 'u8[8192]{0}', space=vmem, size = 0x2000, scoped, tag = 'input window, operand 0, single buffered']
    #allocation3 [shape = 's32[1]{0}', space=sflag, size = 0x4, scoped, tag = 'scoped memory for tpu_custom_call.1']
    #allocation4 [shape = 's32[1]{0}', space=sflag, size = 0x4, scoped, tag = 'scoped memory for tpu_custom_call.1']
    #allocation5 [shape = 'u8[8192]{0}', space=vmem, size = 0x2000, scoped, tag = 'input window, operand 1, single buffered']
    #allocation6 [shape = 's32[1]{0}', space=sflag, size = 0x4, scoped, tag = 'scoped memory for tpu_custom_call.1']
    #allocation7 [shape = 'u8[8192]{0}', space=vmem, size = 0x2000, scoped, tag = 'output window, operand 0, single buffered']
    %8 = vsyncpa [#allocation3], 0
    %9 = vsyncpa [#allocation6], 0
    %10 = vsyncpa [#allocation4], 0
    // Predicated region
    $region2: #{tpu_custom_call.1} parent=1 // pred_check
      _
    $region3: #{tpu_custom_call.1} parent=1 // pred_check_branch
      %12 = sbr.rel (0) target = $region5
    $region4: #{tpu_custom_call.1} parent=1 // pred_region
      %s14 = ssub.s32 256, 128
      %15 = vsyncadd [#allocation3], %s14
      %s16 = sshll.u32 [#allocation2], 4
      %s17 = int_to_ptr.vmem [resolvable:$true] %s16
      %22 = dma.hbm_to_vmem [thread:$0]  %s0, 128, %s17, [#allocation3], 128, 128, 8
    $region5: #{tpu_custom_call.1} parent=1 // pred_fallthru
      _
    // Predicated region
    $region6: #{tpu_custom_call.1} parent=1 // pred_check
      _
    $region7: #{tpu_custom_call.1} parent=1 // pred_check_branch
      %24 = sbr.rel (0) target = $region9
    $region8: #{tpu_custom_call.1} parent=1 // pred_region
      %s26 = ssub.s32 256, 256
      %27 = vsyncadd [#allocation6], %s26
      %s28 = sshll.u32 [#allocation5], 4
      %s29 = int_to_ptr.vmem [resolvable:$true] %s28
      %34 = dma.hbm_to_vmem [thread:$0]  %s1, 256, %s29, [#allocation6], 64, 64, 4
    $region9: #{tpu_custom_call.1} parent=1 // pred_fallthru
      _
    // Predicated region
    $region10: #{tpu_custom_call.1} parent=1 // pred_check
      _
    $region11: #{tpu_custom_call.1} parent=1 // pred_check_branch
      %36 = sbr.rel (0) target = $region13
    $region12: #{tpu_custom_call.1} parent=1 // pred_region
      _
    $region13: #{tpu_custom_call.1} parent=1 // pred_fallthru
      _
    // Predicated region
    $region14: #{tpu_custom_call.1} parent=1 // pred_check
      _
    $region15: #{tpu_custom_call.1} parent=1 // pred_check_branch
      %38 = sbr.rel (0) target = $region17
    $region16: #{tpu_custom_call.1} parent=1 // pred_region
      %39 = dma.done [#allocation3], 256
    $region17: #{tpu_custom_call.1} parent=1 // pred_fallthru
      _
    // Predicated region
    $region18: #{tpu_custom_call.1} parent=1 // pred_check
      _
    $region19: #{tpu_custom_call.1} parent=1 // pred_check_branch
      %41 = sbr.rel (0) target = $region21
    $region20: #{tpu_custom_call.1} parent=1 // pred_region
      %42 = dma.done [#allocation6], 256
    $region21: #{tpu_custom_call.1} parent=1 // pred_fallthru
      _
    %v44 = vld [vmem:[#allocation2] sm:$0xff]
    %v45 = vld [vmem:[#allocation2 + $0x8] sm:$0xff]
    %v46 = vpack.c.bf16 %v45, %v44
    %v47 = vld [vmem:[#allocation5] sm:$0xf]
    %v48 = vld [vmem:[#allocation5 + $0x4] sm:$0xf]
    %v49 = vld [vmem:[#allocation5 + $0x8] sm:$0xf]
    %v50 = vld [vmem:[#allocation5 + $0xc] sm:$0xf]
    %v51 = vld [vmem:[%s2] sm:$0x1]
    %v53 = vlaneseq
    %v54 = vshrl.u32 %v53, 7
    %v55 = vsub.s32 0, %v54
    %v56 = vrot.slane %v51, %v55
    %v62 = vunpack.c.l.b16 %v47
    %v63 = vunpack.c.l.b16 %v48
    %v64 = vunpack.c.l.b16 %v49
    %v65 = vunpack.c.l.b16 %v50
    %v66 = vpack.c.b16 %v63, %v62
    %v67 = vpack.c.b16 %v65, %v64
    %vm70 = vcmask 261120
    %v72 = vsel %vm70, %v46, 0
    %74 = vmatprep.subr.bf16.mxu0 0
    %75 = vmatpush1.bf16.msra.mxu0 %v66
    %76 = vmatprep.subr.bf16.mxu0 0
    %77 = vmatpush1.bf16.msra.mxu0 %v67
    %78 = vmatprep.subr.bf16.mxu0 0
    %79 = vmatpush1.bf16.msra.mxu0 0
    %80 = vmatprep.subr.bf16.mxu0 0
    %81 = vmatpush1.bf16.msra.mxu0 0
    %82 = vmatprep.subr.bf16.mxu0 0
    %83 = vmatpush1.bf16.msra.mxu0 0
    %84 = vmatprep.subr.bf16.mxu0 0
    %85 = vmatpush1.bf16.msra.mxu0 0
    %86 = vmatprep.subr.bf16.mxu0 0
    %87 = vmatpush1.bf16.msra.mxu0 0
    %88 = vmatprep.subr.bf16.mxu0 0
    %89 = vmatpush1.bf16.msra.mxu0 0
    %90 = vmatprep.subr.bf16.mxu0 0
    %91 = vmatpush1.bf16.msra.mxu0 0
    %92 = vmatprep.subr.bf16.mxu0 0
    %93 = vmatpush1.bf16.msra.mxu0 0
    %94 = vmatprep.subr.bf16.mxu0 0
    %95 = vmatpush1.bf16.msra.mxu0 0
    %96 = vmatprep.subr.bf16.mxu0 0
    %97 = vmatpush1.bf16.msra.mxu0 0
    %98 = vmatprep.subr.bf16.mxu0 0
    %99 = vmatpush1.bf16.msra.mxu0 0
    %100 = vmatprep.subr.bf16.mxu0 0
    %101 = vmatpush1.bf16.msra.mxu0 0
    %102 = vmatprep.subr.bf16.mxu0 0
    %103 = vmatpush1.bf16.msra.mxu0 0
    %104 = vmatprep.subr.bf16.mxu0 0
    %105 = vmatpush1.bf16.msra.mxu0 0
    %106 = vmatprep.mubr.bf16.mxu0 0
    %107 = vmatmul.mubr.bf16.gmra.mrb[0].mxu0 %v72
    %v108 = vpop.f32.mrb[0].mxu0
    %v109 = vadd.f32 %v56, %v108
    %v110 = vpop.f32.mrb[0].mxu0
    %v111 = vpop.f32.mrb[0].mxu0
    %v112 = vadd.f32 %v56, %v111
    %v113 = vpop.f32.mrb[0].mxu0
    %114 = vdwg.mxu0
    %115 = vmax.xlane.f32.xlu0 %v109
    %v116 = vpop.xlane.xlu0 %115
    %117 = vmax.xlane.f32.xlu0 %v112
    %v118 = vpop.xlane.xlu0 %117
    %v119 = vsub.f32 %v109, %v116
    %v120 = vsub.f32 %v112, %v118
    %v121 = vmul.f32 %v119, 1.442695
    %v122 = vpow.pop %v121
    %v123 = vmul.f32 %v120, 1.442695
    %v124 = vpow.pop %v123
    %125 = vadd.xlane.f32.xlu0 %v122
    %v126 = vpop.xlane.xlu0 %125
    %127 = vadd.xlane.f32.xlu0 %v124
    %v128 = vpop.xlane.xlu0 %127
    %v129 = vlog2.pop %v126
    %v130 = vmul.f32 %v129, 0.6931472
    %v131 = vlog2.pop %v128
    %v132 = vmul.f32 %v131, 0.6931472
    %v133 = vsub.f32 %v119, %v130
    %v134 = vsub.f32 %v120, %v132
    %vm135 = vcmask 130048
    %136 = vst.msk [vmem:[#allocation7] sm:$0xff] %vm135, %v133
    %137 = vst.msk [vmem:[#allocation7 + $0x8] sm:$0xff] %vm135, %v134
    // Predicated region
    $region22: #{tpu_custom_call.1} parent=1 // pred_check
      _
    $region23: #{tpu_custom_call.1} parent=1 // pred_check_branch
      %139 = sbr.rel (0) target = $region25
    $region24: #{tpu_custom_call.1} parent=1 // pred_region
      %s141 = ssub.s32 256, 128
      %142 = vsyncadd [#allocation4], %s141
      %s143 = sshll.u32 [#allocation7], 4
      %s144 = int_to_ptr.vmem [resolvable:$true] %s143
      %149 = dma.vmem_to_hbm [thread:$0]  %s144, 128, %s3, [#allocation4], 128, 128, 8
    $region25: #{tpu_custom_call.1} parent=1 // pred_fallthru
      _
    // Predicated region
    $region26: #{tpu_custom_call.1} parent=1 // pred_check
      _
    $region27: #{tpu_custom_call.1} parent=1 // pred_check_branch
      %151 = sbr.rel (0) target = $region29
    $region28: #{tpu_custom_call.1} parent=1 // pred_region
      %152 = dma.done [#allocation4], 256
    $region29: #{tpu_custom_call.1} parent=1 // pred_fallthru
      _
    %153 = vsyncpa [#allocation3], 1
    %154 = vsyncpa [#allocation6], 1
    %155 = vsyncpa [#allocation4], 1

</llo_original>
